<compile_context>
chip_gen: v7x
topology: tpu7x:2x2x1
jax: 0.10.0
libtpu: 0.0.40
codegen_flags: <defaults>
</compile_context>

<pallas_src>
import jax
import jax.numpy as jnp
from jax.experimental import pallas as pl
from jax.experimental.pallas import tpu as pltpu


def _round_up(x, m):
    return ((x + m - 1) // m) * m


def _tpu_vmem_caps():
    """Generation-gated (budget, scoped-limit) in bytes."""
    cap = None
    try:
        info = pltpu.get_tpu_info()
        cap = int(getattr(info, "vmem_capacity_bytes", 0)) or None
    except Exception:
        cap = None
    if cap is None:
        cap = 64 * 1024 * 1024              # assume the smallest (v7x per-TC)
    limit = max(32 * 1024 * 1024, min(cap // 2, 64 * 1024 * 1024))
    budget = min(limit // 2, 24 * 1024 * 1024)
    return budget, limit


def _default_n_split():
    """2 only on parts with 2 TensorCores per Pallas device (megacore)."""
    try:
        kind = jax.devices()[0].device_kind.lower()
    except Exception:
        return 1
    return 2 if any(tag in kind for tag in ("v4", "v5p", "v7")) else 1


def _make_dice_kernel(C, k):
    """Kernel accumulating per-class (intersect, sum(p^2), sum(onehot)).

    Logit rows are laid out as r = class*k + pixel_chunk (k = sublane packing
    factor); labels arrive as a (k, TL) block and are tiled over classes.
    """
    kC = k * C
    log2k = k.bit_length() - 1

    def kernel(x_ref, t_ref, out_ref, i_acc, z_acc, y_acc):
        b = pl.program_id(1)                 # batch index       (arbitrary)
        t = pl.program_id(2)                 # pixel-tile index  (arbitrary)

        @pl.when(jnp.logical_and(b == 0, t == 0))
        def _():
            i_acc[...] = jnp.zeros_like(i_acc)
            z_acc[...] = jnp.zeros_like(z_acc)
            y_acc[...] = jnp.zeros_like(y_acc)

        x = x_ref[0].astype(jnp.float32)     # (kC, TL) logits (upcast in-VMEM)
        TL = x.shape[1]

        # ---- softmax over classes --------------------------------------
        if k == 1:
            m = jnp.max(x, axis=0, keepdims=True)            # (1, TL)
            e = jnp.exp(x - m)
            denom = jnp.sum(e, axis=0, keepdims=True)        # (1, TL)
        else:
            # Classes for one pixel live at sublane stride k; a log2 roll tree
            # gives every row its own pixel's class max / class sum (XLU work,
            # runs in parallel with the VPU).
            m = x
            shift = kC // 2
            while shift >= k:
                m = jnp.maximum(m, pltpu.roll(m, shift=shift, axis=0))
                shift //= 2
            e = jnp.exp(x - m)
            denom = e
            shift = kC // 2
            while shift >= k:
                denom = denom + pltpu.roll(denom, shift=shift, axis=0)
                shift //= 2
        score = e * pl.reciprocal(denom, approx=True)        # (kC, TL)

        # ---- labels / masks (sentinel label == C means invalid) --------
        labels = t_ref[0].astype(jnp.int32)                  # (k, TL)
        labels_b = jnp.tile(labels, (C, 1)) if C > 1 else labels   # (kC, TL)
        row_ids = jax.lax.broadcasted_iota(jnp.int32, (kC, TL), 0)
        class_ids = jnp.right_shift(row_ids, log2k) if k > 1 else row_ids
        hit = labels_b == class_ids          # hit implies valid (sentinel==C)
        valid = labels_b < C                 # masked / padded pixels -> False

        # Select-not-multiply: NaN/Inf from garbage padded columns is dropped
        # by the select before any reduction touches it.
        int_c = jnp.where(hit, score, 0.0)
        sv = jnp.where(valid, score, 0.0)
        onehot = jnp.where(hit, 1.0, 0.0)

        # Per-step lane reduce into tiny scratch (no (kC, TL) RMW streams).
        i_acc[...] += jnp.sum(int_c, axis=1, keepdims=True)
        z_acc[...] += jnp.sum(sv * sv, axis=1, keepdims=True)
        y_acc[...] += jnp.sum(onehot, axis=1, keepdims=True)

        @pl.when(jnp.logical_and(b == pl.num_programs(1) - 1,
                                 t == pl.num_programs(2) - 1))
        def _():
            out_ref[0] = jnp.concatenate(
                [i_acc[...], z_acc[...], y_acc[...]], axis=1)   # (kC, 3)

    return kernel


def dice_loss_pallas(inputs, target, n_classes, weights=None, mask=None,
                     tile_lanes=None, n_split=None, vmem_budget_bytes=None):
    """inputs: (N, C, H, W) logits (f32 or bf16); target: (N, H, W) int labels;
    mask: optional (N, H, W) validity mask (>0 is valid). Scalar f32 loss."""
    N, C, H, W = inputs.shape
    assert C == n_classes
    HW = H * W

    vmem_budget, vmem_limit = _tpu_vmem_caps()
    if vmem_budget_bytes is not None:
        vmem_budget = vmem_budget_bytes
    if n_split is None:
        n_split = _default_n_split()

    # Sublane packing: with C < 8 classes, pack k = 8 // C pixel "chunks" into
    # the otherwise empty sublanes via a free, contiguous reshape (no HBM
    # transpose).  Needs C | 8 and k | HW; otherwise fall back to k = 1.
    k = 8 // C if (C <= 8 and 8 % C == 0) else 1
    if k > 1 and HW % k != 0:
        k = 1
    kC = k * C
    HWk = HW // k

    # Layout-preserving reshape only: row r of the kC axis = (class r//k,
    # pixel chunk r%k).
    x3d = inputs.reshape(N, kC, HWk)

    x_bytes = jnp.dtype(inputs.dtype).itemsize
    tgt_dtype = jnp.int8 if n_classes < 127 else jnp.int32
    t_bytes = jnp.dtype(tgt_dtype).itemsize

    # Lane-tile size purely from the VMEM budget: double-buffered inputs plus
    # ~10 (kC, TL) f32 temporaries.  (Bigger tiles amortize ~0.35 us/step.)
    if tile_lanes is None:
        per_lane = 2 * (kC * x_bytes + k * t_bytes) + 10 * kC * 4
        tile_lanes = (vmem_budget // per_lane) // 512 * 512
        tile_lanes = min(65536, max(512, tile_lanes))
    tile_lanes = max(128, _round_up(tile_lanes, 128))
    tile_lanes = min(tile_lanes, _round_up(HWk, 128))

    t_tiles = -(-HWk // tile_lanes)              # real lane-tiles per sample
    n_split = max(1, min(n_split, t_tiles))      # don't emit all-padded splits
    t_split = -(-t_tiles // n_split)             # tiles per split
    lanes_pad = n_split * t_split * tile_lanes   # padded label lane length

    # Fold the validity mask into the labels as a sentinel (label == C).
    # Out-of-range labels are silently "no class" (matches one_hot reference);
    # padded lanes are sentinel so OOB logits blocks never contribute.
    sentinel = n_classes
    tgt = target.reshape(N, 1, HW)
    if mask is not None:
        tgt = jnp.where(mask.reshape(N, 1, HW) > 0, tgt, sentinel)
    tgt = tgt.reshape(N, k, HWk).astype(tgt_dtype)
    tgt = jnp.pad(tgt, ((0, 0), (0, 0), (0, lanes_pad - HWk)),
                  constant_values=sentinel)

    grid = (n_split, N, t_split)

    def x_index(s, b, t):
        # Clamp so over-allocated tiles of the last split stay in bounds;
        # their label block is pure sentinel, so they contribute nothing.
        return (b, 0, jnp.minimum(s * t_split + t, t_tiles - 1))

    def t_index(s, b, t):
        return (b, 0, s * t_split + t)

    kernel = _make_dice_kernel(C, k)
    sums = pl.pallas_call(
        kernel,
        out_shape=jax.ShapeDtypeStruct((n_split, kC, 3), jnp.float32),
        grid_spec=pltpu.PrefetchScalarGridSpec(
            num_scalar_prefetch=0,
            grid=grid,
            in_specs=[
                # bf16 logits from the producer halve HBM bytes on v5e/v6e;
                # add pipeline_mode=pl.Buffered(3) here if DMA is still exposed.
                pl.BlockSpec((1, kC, tile_lanes), x_index),   # logits
                pl.BlockSpec((1, k, tile_lanes), t_index),    # labels+mask
            ],
            out_specs=pl.BlockSpec((1, kC, 3), lambda s, b, t: (s, 0, 0)),
            scratch_shapes=[
                pltpu.VMEM((kC, 1), jnp.float32),   # intersect partials
                pltpu.VMEM((kC, 1), jnp.float32),   # sum(p^2)  partials
                pltpu.VMEM((kC, 1), jnp.float32),   # sum(onehot) partials
            ],
        ),
        compiler_params=pltpu.CompilerParams(
            dimension_semantics=("parallel", "arbitrary", "arbitrary"),
            vmem_limit_bytes=vmem_limit),
    )(x3d, tgt)

    # Tiny dice combine in plain JAX: sum splits, fold the k pixel-chunk rows
    # back into their class, apply class weights and the /n_classes.
    tot = jnp.sum(sums, axis=0).reshape(C, k, 3).sum(axis=1)   # (C, 3)
    intersect, z_sum, y_sum = tot[:, 0], tot[:, 1], tot[:, 2]
    if weights is None:
        weights = [1.0] * n_classes
    w = jnp.asarray(weights, jnp.float32)
    smooth = 1e-5
    dice = 1.0 - (2.0 * intersect + smooth) / (z_sum + y_sum + smooth)
    return jnp.sum(dice * w) / n_classes


def dice_loss_reference(inputs, target, n_classes, weights=None, mask=None):
    """Pure-JAX reference matching the PyTorch module."""
    probs = jax.nn.softmax(inputs, axis=1)
    onehot = jax.nn.one_hot(target, n_classes, axis=1, dtype=jnp.float32)
    if weights is None:
        weights = [1.0] * n_classes
    if mask is None:
        valid = jnp.ones(target.shape, jnp.float32)
    else:
        valid = (mask > 0).astype(jnp.float32)
    smooth = 1e-5
    loss = 0.0
    for i in range(n_classes):
        s = probs[:, i]
        t = onehot[:, i]
        intersect = jnp.sum(s * t * valid)
        y_sum = jnp.sum(t * t * valid)
        z_sum = jnp.sum(s * s * valid)
        loss += (1.0 - (2.0 * intersect + smooth) / (z_sum + y_sum + smooth)) \
            * weights[i]
    return loss / n_classes


if __name__ == "__main__":
    key = jax.random.PRNGKey(0)
    k_x, k_t, k_m = jax.random.split(key, 3)

    N, C, H, W = 2, 4, 16, 16
    inputs = jax.random.normal(k_x, (N, C, H, W), dtype=jnp.float32)
    target = jax.random.randint(k_t, (N, H, W), 0, C, dtype=jnp.int32)

    # 1) default: uniform class weights, no mask
    loss = jax.block_until_ready(dice_loss_pallas(inputs, target, n_classes=C))
    ref = dice_loss_reference(inputs, target, n_classes=C)
    assert jnp.allclose(loss, ref, atol=5e-3, rtol=5e-3), (loss, ref)

    # 2) non-uniform class weights + validity mask (folded into the labels)
    weights = [0.5, 1.0, 2.0, 0.25]
    mask = (jax.random.uniform(k_m, (N, H, W)) > 0.3).astype(jnp.float32)
    loss_m = jax.block_until_ready(
        dice_loss_pallas(inputs, target, n_classes=C, weights=weights,
                         mask=mask))
    ref_m = dice_loss_reference(inputs, target, n_classes=C, weights=weights,
                                mask=mask)
    assert jnp.allclose(loss_m, ref_m, atol=5e-3, rtol=5e-3), (loss_m, ref_m)

    # 3) bf16 logits path (recommended producer dtype on HBM-bound v5e/v6e)
    loss_b = jax.block_until_ready(
        dice_loss_pallas(inputs.astype(jnp.bfloat16), target, n_classes=C))
    ref_b = dice_loss_reference(
        inputs.astype(jnp.bfloat16).astype(jnp.float32), target, n_classes=C)
    assert jnp.allclose(loss_b, ref_b, atol=2e-2, rtol=2e-2), (loss_b, ref_b)

    print("KERNEL_OK")
</pallas_src>

<mosaic_0001>
module attributes {stable_mosaic.version = 11 : i64} {
  func.func @kernel(%arg0: i32, %arg1: i32, %arg2: i32, %arg3: memref<1x8x128xf32, #tpu.memory_space<vmem>>, %arg4: memref<1x2x128xi8, #tpu.memory_space<vmem>>, %arg5: memref<1x8x3xf32, #tpu.memory_space<vmem>>, %arg6: memref<8x1xf32, #tpu.memory_space<vmem>>, %arg7: memref<8x1xf32, #tpu.memory_space<vmem>>, %arg8: memref<8x1xf32, #tpu.memory_space<vmem>>) attributes {dimension_semantics = [#tpu.dimension_semantics<parallel>, #tpu.dimension_semantics<arbitrary>, #tpu.dimension_semantics<arbitrary>], iteration_bounds = array<i64: 1, 2, 1>, scalar_prefetch = 0 : i64, scratch_operands = 3 : i64, tpu.core_type = #tpu.core_type<tc>, window_params = [{transform_indices = @transform_0, window_bounds = array<i64: 1, 8, 128>}, {transform_indices = @transform_1, window_bounds = array<i64: 1, 2, 128>}, {transform_indices = @transform_2, window_bounds = array<i64: 1, 8, 3>}]} {
    %c0_i32 = arith.constant 0 : i32
    %0 = arith.cmpi eq, %arg1, %c0_i32 : i32
    %c0_i32_0 = arith.constant 0 : i32
    %1 = arith.cmpi eq, %arg2, %c0_i32_0 : i32
    %2 = arith.andi %0, %1 : i1
    %3 = arith.extui %2 : i1 to i32
    %c0_i32_1 = arith.constant 0 : i32
    %4 = arith.cmpi ne, %3, %c0_i32_1 : i32
    scf.if %4 {
      %cst_31 = arith.constant 0.000000e+00 : f32
      %57 = vector.broadcast %cst_31 : f32 to vector<8x1xf32>
      %c0_32 = arith.constant 0 : index
      %c0_33 = arith.constant 0 : index
      %58 = vector.load %arg6[%c0_32, %c0_33] : memref<8x1xf32, #tpu.memory_space<vmem>>, vector<8x1xf32>
      tpu.vector_store %arg6[%c0_32, %c0_33], %57 {strides = array<i32>} : memref<8x1xf32, #tpu.memory_space<vmem>>, vector<8x1xf32>,
      %cst_34 = arith.constant 0.000000e+00 : f32
      %59 = vector.broadcast %cst_34 : f32 to vector<8x1xf32>
      %c0_35 = arith.constant 0 : index
      %c0_36 = arith.constant 0 : index
      %60 = vector.load %arg7[%c0_35, %c0_36] : memref<8x1xf32, #tpu.memory_space<vmem>>, vector<8x1xf32>
      tpu.vector_store %arg7[%c0_35, %c0_36], %59 {strides = array<i32>} : memref<8x1xf32, #tpu.memory_space<vmem>>, vector<8x1xf32>,
      %cst_37 = arith.constant 0.000000e+00 : f32
      %61 = vector.broadcast %cst_37 : f32 to vector<8x1xf32>
      %c0_38 = arith.constant 0 : index
      %c0_39 = arith.constant 0 : index
      %62 = vector.load %arg8[%c0_38, %c0_39] : memref<8x1xf32, #tpu.memory_space<vmem>>, vector<8x1xf32>
      tpu.vector_store %arg8[%c0_38, %c0_39], %61 {strides = array<i32>} : memref<8x1xf32, #tpu.memory_space<vmem>>, vector<8x1xf32>,
    } else {
    }
    %c0 = arith.constant 0 : index
    %c0_2 = arith.constant 0 : index
    %c0_3 = arith.constant 0 : index
    %5 = vector.load %arg3[%c0, %c0_2, %c0_3] : memref<1x8x128xf32, #tpu.memory_space<vmem>>, vector<1x8x128xf32>
    %6 = vector.shape_cast %5 : vector<1x8x128xf32> to vector<8x128xf32>
    %c4_i32 = arith.constant 4 : i32
    %7 = tpu.dynamic_rotate %6 by %c4_i32 dim 0 : vector<8x128xf32>, i32 -> vector<8x128xf32>
    %8 = arith.maximumf %6, %7 : vector<8x128xf32>
    %c2_i32 = arith.constant 2 : i32
    %9 = tpu.dynamic_rotate %8 by %c2_i32 dim 0 : vector<8x128xf32>, i32 -> vector<8x128xf32>
    %10 = arith.maximumf %8, %9 : vector<8x128xf32>
    %11 = arith.subf %6, %10 : vector<8x128xf32>
    %12 = math.exp %11 : vector<8x128xf32>
    %c4_i32_4 = arith.constant 4 : i32
    %13 = tpu.dynamic_rotate %12 by %c4_i32_4 dim 0 : vector<8x128xf32>, i32 -> vector<8x128xf32>
    %14 = arith.addf %12, %13 : vector<8x128xf32>
    %c2_i32_5 = arith.constant 2 : i32
    %15 = tpu.dynamic_rotate %14 by %c2_i32_5 dim 0 : vector<8x128xf32>, i32 -> vector<8x128xf32>
    %16 = arith.addf %14, %15 : vector<8x128xf32>
    %17 = tpu.reciprocal %16 {approx = true} : vector<8x128xf32> -> vector<8x128xf32>
    %18 = arith.mulf %12, %17 : vector<8x128xf32>
    %c0_6 = arith.constant 0 : index
    %c0_7 = arith.constant 0 : index
    %c0_8 = arith.constant 0 : index
    %19 = vector.load %arg4[%c0_6, %c0_7, %c0_8] : memref<1x2x128xi8, #tpu.memory_space<vmem>>, vector<1x2x128xi8>
    %20 = vector.shape_cast %19 : vector<1x2x128xi8> to vector<2x128xi8>
    %21 = arith.extsi %20 : vector<2x128xi8> to vector<2x128xi32>
    %22 = tpu.concatenate %21, %21, %21, %21 in 0 : vector<2x128xi32>, vector<2x128xi32>, vector<2x128xi32>, vector<2x128xi32> -> vector<8x128xi32>
    %23 = tpu.iota {dimensions = array<i32: 0>} : vector<8x128xi32>
    %c1_i32 = arith.constant 1 : i32
    %24 = vector.broadcast %c1_i32 : i32 to vector<8x128xi32>
    %25 = arith.shrsi %23, %24 : vector<8x128xi32>
    %26 = arith.cmpi eq, %22, %25 : vector<8x128xi32>
    %c4_i32_9 = arith.constant 4 : i32
    %27 = vector.broadcast %c4_i32_9 : i32 to vector<8x128xi32>
    %28 = arith.cmpi slt, %22, %27 : vector<8x128xi32>
    %cst = arith.constant 0.000000e+00 : f32
    %29 = vector.broadcast %cst : f32 to vector<8x128xf32>
    %30 = arith.select %26, %18, %29 : vector<8x128xi1>, vector<8x128xf32>
    %cst_10 = arith.constant 0.000000e+00 : f32
    %31 = vector.broadcast %cst_10 : f32 to vector<8x128xf32>
    %32 = arith.select %28, %18, %31 : vector<8x128xi1>, vector<8x128xf32>
    %cst_11 = arith.constant 1.000000e+00 : f32
    %cst_12 = arith.constant 0.000000e+00 : f32
    %33 = vector.broadcast %cst_11 : f32 to vector<8x128xf32>
    %34 = vector.broadcast %cst_12 : f32 to vector<8x128xf32>
    %35 = arith.select %26, %33, %34 : vector<8x128xi1>, vector<8x128xf32>
    %c0_13 = arith.constant 0 : index
    %c0_14 = arith.constant 0 : index
    %36 = vector.load %arg6[%c0_13, %c0_14] : memref<8x1xf32, #tpu.memory_space<vmem>>, vector<8x1xf32>
    %cst_15 = arith.constant dense<0.000000e+00> : vector<8xf32>
    %37 = vector.multi_reduction <add>, %30, %cst_15 [1] : vector<8x128xf32> to vector<8xf32>
    %38 = vector.shape_cast %37 : vector<8xf32> to vector<8x1xf32>
    %39 = arith.addf %36, %38 : vector<8x1xf32>
    %c0_16 = arith.constant 0 : index
    %c0_17 = arith.constant 0 : index
    %40 = vector.load %arg6[%c0_16, %c0_17] : memref<8x1xf32, #tpu.memory_space<vmem>>, vector<8x1xf32>
    tpu.vector_store %arg6[%c0_16, %c0_17], %39 {strides = array<i32>} : memref<8x1xf32, #tpu.memory_space<vmem>>, vector<8x1xf32>,
    %c0_18 = arith.constant 0 : index
    %c0_19 = arith.constant 0 : index
    %41 = vector.load %arg7[%c0_18, %c0_19] : memref<8x1xf32, #tpu.memory_space<vmem>>, vector<8x1xf32>
    %42 = arith.mulf %32, %32 : vector<8x128xf32>
    %cst_20 = arith.constant dense<0.000000e+00> : vector<8xf32>
    %43 = vector.multi_reduction <add>, %42, %cst_20 [1] : vector<8x128xf32> to vector<8xf32>
    %44 = vector.shape_cast %43 : vector<8xf32> to vector<8x1xf32>
    %45 = arith.addf %41, %44 : vector<8x1xf32>
    %c0_21 = arith.constant 0 : index
    %c0_22 = arith.constant 0 : index
    %46 = vector.load %arg7[%c0_21, %c0_22] : memref<8x1xf32, #tpu.memory_space<vmem>>, vector<8x1xf32>
    tpu.vector_store %arg7[%c0_21, %c0_22], %45 {strides = array<i32>} : memref<8x1xf32, #tpu.memory_space<vmem>>, vector<8x1xf32>,
    %c0_23 = arith.constant 0 : index
    %c0_24 = arith.constant 0 : index
    %47 = vector.load %arg8[%c0_23, %c0_24] : memref<8x1xf32, #tpu.memory_space<vmem>>, vector<8x1xf32>
    %cst_25 = arith.constant dense<0.000000e+00> : vector<8xf32>
    %48 = vector.multi_reduction <add>, %35, %cst_25 [1] : vector<8x128xf32> to vector<8xf32>
    %49 = vector.shape_cast %48 : vector<8xf32> to vector<8x1xf32>
    %50 = arith.addf %47, %49 : vector<8x1xf32>
    %c0_26 = arith.constant 0 : index
    %c0_27 = arith.constant 0 : index
    %51 = vector.load %arg8[%c0_26, %c0_27] : memref<8x1xf32, #tpu.memory_space<vmem>>, vector<8x1xf32>
    tpu.vector_store %arg8[%c0_26, %c0_27], %50 {strides = array<i32>} : memref<8x1xf32, #tpu.memory_space<vmem>>, vector<8x1xf32>,
    %c1_i32_28 = arith.constant 1 : i32
    %52 = arith.cmpi eq, %arg1, %c1_i32_28 : i32
    %c0_i32_29 = arith.constant 0 : i32
    %53 = arith.cmpi eq, %arg2, %c0_i32_29 : i32
    %54 = arith.andi %52, %53 : i1
    %55 = arith.extui %54 : i1 to i32
    %c0_i32_30 = arith.constant 0 : i32
    %56 = arith.cmpi ne, %55, %c0_i32_30 : i32
    scf.if %56 {
      %c0_31 = arith.constant 0 : index
      %c0_32 = arith.constant 0 : index
      %57 = vector.load %arg6[%c0_31, %c0_32] : memref<8x1xf32, #tpu.memory_space<vmem>>, vector<8x1xf32>
      %c0_33 = arith.constant 0 : index
      %c0_34 = arith.constant 0 : index
      %58 = vector.load %arg7[%c0_33, %c0_34] : memref<8x1xf32, #tpu.memory_space<vmem>>, vector<8x1xf32>
      %c0_35 = arith.constant 0 : index
      %c0_36 = arith.constant 0 : index
      %59 = vector.load %arg8[%c0_35, %c0_36] : memref<8x1xf32, #tpu.memory_space<vmem>>, vector<8x1xf32>
      %60 = tpu.concatenate %57, %58, %59 in 1 : vector<8x1xf32>, vector<8x1xf32>, vector<8x1xf32> -> vector<8x3xf32>
      %c0_37 = arith.constant 0 : index
      %c0_38 = arith.constant 0 : index
      %c0_39 = arith.constant 0 : index
      %61 = vector.load %arg5[%c0_37, %c0_38, %c0_39] : memref<1x8x3xf32, #tpu.memory_space<vmem>>, vector<1x8x3xf32>
      %62 = vector.shape_cast %61 : vector<1x8x3xf32> to vector<8x3xf32>
      %63 = vector.shape_cast %60 : vector<8x3xf32> to vector<1x8x3xf32>
      tpu.vector_store %arg5[%c0_37, %c0_38, %c0_39], %63 {strides = array<i32>} : memref<1x8x3xf32, #tpu.memory_space<vmem>>, vector<1x8x3xf32>,
    } else {
    }
    return
  }
  func.func @transform_0(%arg0: i32, %arg1: i32, %arg2: i32) -> (i32, i32, i32) {
    %c1_i32 = arith.constant 1 : i32
    %0 = arith.muli %arg0, %c1_i32 : i32
    %1 = arith.addi %0, %arg2 : i32
    %c0_i32 = arith.constant 0 : i32
    %2 = arith.minsi %1, %c0_i32 : i32
    %c0_i32_0 = arith.constant 0 : i32
    %c0_i32_1 = arith.constant 0 : i32
    return %arg1, %c0_i32_0, %2 : i32, i32, i32
  }
  func.func @transform_1(%arg0: i32, %arg1: i32, %arg2: i32) -> (i32, i32, i32) {
    %c1_i32 = arith.constant 1 : i32
    %0 = arith.muli %arg0, %c1_i32 : i32
    %1 = arith.addi %0, %arg2 : i32
    %c0_i32 = arith.constant 0 : i32
    %c0_i32_0 = arith.constant 0 : i32
    return %arg1, %c0_i32, %1 : i32, i32, i32
  }
  func.func @transform_2(%arg0: i32, %arg1: i32, %arg2: i32) -> (i32, i32, i32) {
    %c0_i32 = arith.constant 0 : i32
    %c0_i32_0 = arith.constant 0 : i32
    %c0_i32_1 = arith.constant 0 : i32
    return %arg0, %c0_i32, %c0_i32_0 : i32, i32, i32
  }
}

</mosaic_0001>

<llo_original>
// kernel: tpu_custom_call.1
$region0: #{tpu_custom_call.1}
  #allocation0 [shape = 'u32[]', space=smem, size = 0x4, offset = 0x4, fixed_abs, tag = 'smem constant byte address 0x4 - core index']
  #allocation1 [shape = 'u32[144,128]{1,0:T(1,128)}', space=vmem, size = 0x12000, scoped, tag = 'internal scratch']
  #allocation2 [shape = 'f32[8,1]{1,0:T(8,128)}', space=vmem, size = 0x1000, scoped, tag = 'scratch operand']
  #allocation3 [shape = 'f32[8,1]{1,0:T(8,128)}', space=vmem, size = 0x1000, scoped, tag = 'scratch operand']
  #allocation4 [shape = 'f32[8,1]{1,0:T(8,128)}', space=vmem, size = 0x1000, scoped, tag = 'scratch operand']
  %s0 = inlined_call_operand.hbm [shape: f32[2,8,128], index: 0, kind: input, shape index: {}]
  %s1 = inlined_call_operand.vmem [shape: s8[2,2,128], index: 1, kind: input, shape index: {}]
  %s2 = inlined_call_operand.vmem [shape: f32[1,8,3], index: 2, kind: output, shape index: {}]
  %s3 = sld [smem:[#allocation0]]
  $region53: #{tpu_custom_call.1} parent=0
    _
  %s5 = ssub.s32 1, %s3
  %s6 = scalar_select 0, %s5, %s3
  $region1: #{tpu_custom_call.1} parent=0
    #allocation5 [shape = 'u8[8192]{0}', space=vmem, size = 0x2000, scoped, tag = 'input window, operand 0']
    #allocation6 [shape = 's32[2]{0}', space=sflag, size = 0x8, scoped, tag = 'scoped memory for tpu_custom_call.1']
    %7 = vsyncpa [#allocation6], 0
    %s8 = scalar_lea.sflag [#allocation6], 1
    %9 = vsyncpa %s8, 0
    loop: start=0, step=1, limit=4
    $region2: #{tpu_custom_call.1} parent=1 // loop_pre_header
      _
    $region3: #{tpu_custom_call.1} parent=1 // loop_header
      %s11 = sphi 0, %s15
      %p12 = scmp.ge.s32.totalorder %s11, 4
      %s18 = sphi 0, %s37
      %s19 = sphi 0, %s33
      %s20 = sphi 0, %s29
      %s21 = sphi 0, %s18
      %s22 = sphi 0, %s19
      %s23 = sphi 0, %s20
      %s24 = sphi 0, %s21
      %s25 = sphi 0, %s22
      %s26 = sphi 0, %s23
      %s48 = sphi 0, %s50
      %s51 = sphi 0, %s48
      %s52 = sphi 0, %s51
      %s68 = sphi 0, %s52
      %s78 = sphi 0, %s80
      %s81 = sphi 0, %s78
      %s82 = sphi 0, %s81
      %s98 = sphi 0, %s82
      %s104 = sphi 0, %s106
      %s107 = sphi 0, %s104
      %s108 = sphi 0, %s107
      %s124 = sphi 0, %s108
    $region4: #{tpu_custom_call.1} parent=1 // loop_header_branch
      %14 = sbr.rel (%p12) target = $region8
    $region5: #{tpu_custom_call.1} parent=1 // loop_body
      %s16 = ssub.s32 %s11, 1
      %s17 = ssub.s32 %s11, 2
      %s27 = sadd.s32 1, %s20
      %p28 = scmp.ge.s32.totalorder %s27, 1
      %s29 = scalar_select %p28, 0, %s27
      %s30 = sadd.s32 1, %s19
      %s31 = scalar_select %p28, %s30, %s19
      %p32 = scmp.ge.s32.totalorder %s31, 2
      %s33 = scalar_select %p32, 0, %s31
      %s34 = sadd.s32 1, %s18
      %s35 = scalar_select %p32, %s34, %s18
      %p36 = scmp.ge.s32.totalorder %s35, 1
      %s37 = scalar_select %p36, 0, %s35
      %s38 = sadd.s32 %s18, %s20
      %p39 = scmp.lt.s32.totalorder %s38, 0
      %s40 = scalar_select %p39, %s38, 0
      %s41 = sadd.s32 %s37, %s29
      %p42 = scmp.lt.s32.totalorder %s41, 0
      %s43 = scalar_select %p42, %s41, 0
      %s44 = ssub.s32 %s19, %s33
      %s45 = ssub.s32 %s40, %s43
      %s46 = sor.u32 %s44, %s45
      %p47 = scmp.eq.s32.totalorder %s46, 0
      %s49 = sadd.s32 %s48, 1
      %s50 = scalar_select %p47, %s48, %s49
      %p53 = pneg %p47
      %p54 = scmp.eq.s32.totalorder %s11, 1
      %p55 = por %p53, %p54
      %p56 = scmp.ne.s32.totalorder %s48, %s51
      %p57 = scmp.eq.s32.totalorder %s11, 0
      %p58 = por %p56, %p57
      %p59 = scmp.ne.s32.totalorder %s48, %s51
      %p60 = scmp.eq.s32.totalorder %s16, 1
      %p61 = por %p59, %p60
      %p62 = scmp.ne.s32.totalorder %s51, %s52
      %p63 = scmp.eq.s32.totalorder %s16, 0
      %p64 = por %p62, %p63
      %p65 = scmp.ne.s32.totalorder %s51, %s52
      %p66 = scmp.eq.s32.totalorder %s17, 1
      %p67 = por %p65, %p66
      %p69 = scmp.ne.s32.totalorder %s52, %s68
      %p70 = scmp.eq.s32.totalorder %s17, 0
      %p71 = por %p69, %p70
      %s72 = sadd.s32 %s18, %s20
      %s73 = sadd.s32 %s37, %s29
      %s74 = ssub.s32 %s19, %s33
      %s75 = ssub.s32 %s72, %s73
      %s76 = sor.u32 %s74, %s75
      %p77 = scmp.eq.s32.totalorder %s76, 0
      %s79 = sadd.s32 %s78, 1
      %s80 = scalar_select %p77, %s78, %s79
      %p83 = pneg %p77
      %p84 = scmp.eq.s32.totalorder %s11, 1
      %p85 = por %p83, %p84
      %p86 = scmp.ne.s32.totalorder %s78, %s81
      %p87 = scmp.eq.s32.totalorder %s11, 0
      %p88 = por %p86, %p87
      %p89 = scmp.ne.s32.totalorder %s78, %s81
      %p90 = scmp.eq.s32.totalorder %s16, 1
      %p91 = por %p89, %p90
      %p92 = scmp.ne.s32.totalorder %s81, %s82
      %p93 = scmp.eq.s32.totalorder %s16, 0
      %p94 = por %p92, %p93
      %p95 = scmp.ne.s32.totalorder %s81, %s82
      %p96 = scmp.eq.s32.totalorder %s17, 1
      %p97 = por %p95, %p96
      %p99 = scmp.ne.s32.totalorder %s82, %s98
      %p100 = scmp.eq.s32.totalorder %s17, 0
      %p101 = por %p99, %p100
      %s102 = ssub.s32 %s18, %s37
      %p103 = scmp.eq.s32.totalorder %s102, 0
      %s105 = sadd.s32 %s104, 1
      %s106 = scalar_select %p103, %s104, %s105
      %p109 = pneg %p103
      %p110 = scmp.eq.s32.totalorder %s11, 1
      %p111 = por %p109, %p110
      %p112 = scmp.ne.s32.totalorder %s104, %s107
      %p113 = scmp.eq.s32.totalorder %s11, 0
      %p114 = por %p112, %p113
      %p115 = scmp.ne.s32.totalorder %s104, %s107
      %p116 = scmp.eq.s32.totalorder %s16, 1
      %p117 = por %p115, %p116
      %p118 = scmp.ne.s32.totalorder %s107, %s108
      %p119 = scmp.eq.s32.totalorder %s16, 0
      %p120 = por %p118, %p119
      %p121 = scmp.ne.s32.totalorder %s107, %s108
      %p122 = scmp.eq.s32.totalorder %s17, 1
      %p123 = por %p121, %p122
      %p125 = scmp.ne.s32.totalorder %s108, %s124
      %p126 = scmp.eq.s32.totalorder %s17, 0
      %p127 = por %p125, %p126
      %p128 = scmp.le.s32.totalorder 1, %s11
      %p129 = scmp.lt.s32.totalorder %s11, 3
      %p130 = pnand %p128, %p129
      %p131 = pneg %p130
      // Predicated region
      $region9: #{tpu_custom_call.1} parent=5 // pred_check
        _
      $region10: #{tpu_custom_call.1} parent=5 // pred_check_branch
        %133 = sbr.rel (%p130) target = $region12
      $region11: #{tpu_custom_call.1} parent=5 // pred_region
        %s134 = ssub.s32 %s11, 1
      $region12: #{tpu_custom_call.1} parent=5 // pred_fallthru
        _
      %p135 = scmp.lt.s32.totalorder %s11, 2
      // Predicated region
      $region13: #{tpu_custom_call.1} parent=5 // pred_check
        %p136 = pneg %p135
      $region14: #{tpu_custom_call.1} parent=5 // pred_check_branch
        %138 = sbr.rel (%p136) target = $region16
      $region15: #{tpu_custom_call.1} parent=5 // pred_region
        // Predicated region
        $region17: #{tpu_custom_call.1} parent=15 // pred_check
          %p139 = pneg %p58
        $region18: #{tpu_custom_call.1} parent=15 // pred_check_branch
          %141 = sbr.rel (%p139) target = $region20
        $region19: #{tpu_custom_call.1} parent=15 // pred_region
          %s142 = sand.u32 %s48, 1
          %s143 = scalar_lea.sflag [#allocation6], %s142
          %s144 = sand.u32 %s48, 1
          %s145 = smul.addr %s144, 8
          %s146 = scalar_lea.vmem [#allocation5], %s145
          %s147 = sadd.s32 %s18, %s20
          %p148 = scmp.lt.s32.totalorder %s147, 0
          %s149 = scalar_select %p148, %s147, 0
          %s151 = ssub.s32 128, 128
          %152 = vsyncadd %s143, %s151
          %s153 = sadd.s32 %s149, %s19
          %s154 = smul.addr %s153, 128
          %s155 = scalar_lea.hbm %s0, %s154
          %s157 = sshll.u32 %s146, 4
          %s158 = int_to_ptr.vmem [resolvable:$true] %s157
          %160 = dma.hbm_to_vmem [thread:$0]  %s155, 128, %s158, %s143
        $region20: #{tpu_custom_call.1} parent=15 // pred_fallthru
          _
        // Predicated region
        $region21: #{tpu_custom_call.1} parent=15 // pred_check
          %p161 = pneg %p88
        $region22: #{tpu_custom_call.1} parent=15 // pred_check_branch
          %163 = sbr.rel (%p161) target = $region24
        $region23: #{tpu_custom_call.1} parent=15 // pred_region
          %s164 = sadd.s32 %s18, %s20
          %p165 = scmp.lt.s32.totalorder %s19, 1
          %s166 = scalar_select %p165, %s19, 1
          %p167 = scmp.lt.s32.totalorder %s164, 0
          %s168 = scalar_select %p167, %s164, 0
          %s169 = sadd.s32 %s168, %s166
          %s170 = scalar_lea.vmem %s1, %s169
          %s171 = sadd.s32 %s18, %s20
        $region24: #{tpu_custom_call.1} parent=15 // pred_fallthru
          _
      $region16: #{tpu_custom_call.1} parent=5 // pred_fallthru
        _
      %p172 = scmp.le.s32.totalorder 1, %s11
      %p173 = scmp.lt.s32.totalorder %s11, 3
      %p174 = pnand %p172, %p173
      %p175 = pneg %p174
      // Predicated region
      $region25: #{tpu_custom_call.1} parent=5 // pred_check
        _
      $region26: #{tpu_custom_call.1} parent=5 // pred_check_branch
        %177 = sbr.rel (%p174) target = $region28
      $region27: #{tpu_custom_call.1} parent=5 // pred_region
        %s178 = ssub.s32 %s11, 1
        %s179 = sand.u32 %s51, 1
        %s180 = scalar_lea.sflag [#allocation6], %s179
        %s181 = sand.u32 %s51, 1
        %s182 = smul.addr %s181, 8
        %s183 = scalar_lea.vmem [#allocation5], %s182
        // Predicated region
        $region29: #{tpu_custom_call.1} parent=27 // pred_check
          %p184 = pneg %p64
        $region30: #{tpu_custom_call.1} parent=27 // pred_check_branch
          %186 = sbr.rel (%p184) target = $region32
        $region31: #{tpu_custom_call.1} parent=27 // pred_region
          %187 = dma.done %s180, 128
        $region32: #{tpu_custom_call.1} parent=27 // pred_fallthru
          _
        %s188 = sand.u32 %s51, 1
        %s189 = scalar_lea.sflag [#allocation6], %s188
        %s190 = sand.u32 %s51, 1
        %s191 = smul.addr %s190, 8
        %s192 = scalar_lea.vmem [#allocation5], %s191
        %p193 = pneg %p64
        %p194 = pneg %p61
        %s195 = sadd.s32 %s21, %s23
        %p196 = scmp.lt.s32.totalorder %s22, 1
        %s197 = scalar_select %p196, %s22, 1
        %p198 = scmp.lt.s32.totalorder %s195, 0
        %s199 = scalar_select %p198, %s195, 0
        %s200 = sadd.s32 %s199, %s197
        %s201 = scalar_lea.vmem %s1, %s200
        %p202 = pneg %p94
        %p203 = pneg %p91
        %p204 = pneg %p120
        %p205 = pneg %p117
        %p206 = scmp.lt.s32.totalorder %s21, 0
        %s207 = scalar_select %p206, %s21, 0
        %s208 = smul.addr %s207, 8
        %s209 = scalar_lea.vmem %s2, %s208
        %s210 = sadd.s32 %s21, %s23
        %p211 = scmp.lt.s32.totalorder %s210, 0
        %s212 = scalar_select %p211, %s210, 0
        %s213 = sadd.s32 %s21, %s23
        %p214 = scmp.lt.s32.totalorder %s22, 1
        %s215 = scalar_select %p214, %s22, 1
        %p216 = scmp.lt.s32.totalorder %s213, 0
        %s217 = scalar_select %p216, %s213, 0
        %s218 = sadd.s32 %s217, %s215
        %s219 = scalar_lea.vmem %s1, %s218
        %s220 = sadd.s32 %s21, %s23
        %p221 = scmp.lt.s32.totalorder %s21, 0
        %s222 = scalar_select %p221, %s21, 0
        %s223 = smul.addr %s222, 8
        %s224 = scalar_lea.vmem %s2, %s223
        %p225 = scmp.eq.s32.totalorder %s22, 0
        %p226 = scmp.eq.s32.totalorder %s23, 0
        %p227 = pnand %p225, %p226
        %p228 = pneg %p227
        // Predicated region
        $region33: #{tpu_custom_call.1} parent=27 // pred_check
          _
        $region34: #{tpu_custom_call.1} parent=27 // pred_check_branch
          %230 = sbr.rel (%p227) target = $region36
        $region35: #{tpu_custom_call.1} parent=27 // pred_region
          %vm231 = vcmask 7168
          %232 = vst.msk [vmem:[#allocation2] sm:$0xff] %vm231, 0.0
          %233 = vst.msk [vmem:[#allocation3] sm:$0xff] %vm231, 0.0
          %234 = vst.msk [vmem:[#allocation4] sm:$0xff] %vm231, 0.0
        $region36: #{tpu_custom_call.1} parent=27 // pred_fallthru
          _
        %v235 = vld [vmem:[%s183] sm:$0xff]
        %v236 = vrot.slane %v235, 4
        %v237 = vmax.f32 %v235, %v236
        %v238 = vrot.slane %v237, 6
        %v239 = vmax.f32 %v237, %v238
        %v240 = vsub.f32 %v235, %v239
        %v241 = vmul.f32 %v240, 1.442695
        %v242 = vpow.pop %v241
        %v243 = vrot.slane %v242, 4
        %v244 = vadd.f32 %v242, %v243
        %v245 = vrot.slane %v244, 6
        %v246 = vadd.f32 %v244, %v245
        %v247 = vrcp.pop %v246
        %v248 = vmul.f32 %v242, %v247
        %v249 = vld [vmem:[%s219] sm:$0x1]
        %v250 = vunpack.c.0.s8 %v249
        %v251 = vrot.slane %v250, 6
        %v252 = vcombine.low %v250, %v250
        %v253 = vrot.slane %v250, 2
        %vm254 = vcmask 1041408
        %v255 = vsel %vm254, %v250, %v251
        %vm256 = vcmask 1043456
        %v257 = vsel %vm256, %v255, %v252
        %vm258 = vcmask 1045504
        %v259 = vsel %vm258, %v257, %v253
        %v260 = vlaneseq
        %v261 = vshrl.u32 %v260, 7
        %v262 = vshra.s32 %v261, 1
        %vm263 = vcmp.eq.s32.totalorder %v259, %v262
        %vm264 = vcmp.lt.s32.totalorder %v259, 4
        %v265 = vsel %vm263, %v248, 0.0
        %v266 = vsel %vm264, %v248, 0.0
        %v267 = vsel %vm263, 1.0, 0.0
        %v268 = vld [vmem:[#allocation2] sm:$0xff]
        %269 = vadd.xlane.f32.xlu0 %v265
        %v270 = vpop.xlane.xlu0 %269
        %v271 = vadd.f32 %v268, %v270
        %vm272 = vcmask 7168
        %273 = vst.msk [vmem:[#allocation2] sm:$0xff] %vm272, %v271
        %v274 = vld [vmem:[#allocation3] sm:$0xff]
        %v275 = vmul.f32 %v266, %v266
        %276 = vadd.xlane.f32.xlu0 %v275
        %v277 = vpop.xlane.xlu0 %276
        %v278 = vadd.f32 %v274, %v277
        %279 = vst.msk [vmem:[#allocation3] sm:$0xff] %vm272, %v278
        %v280 = vld [vmem:[#allocation4] sm:$0xff]
        %281 = vadd.xlane.f32.xlu0 %v267
        %v282 = vpop.xlane.xlu0 %281
        %v283 = vadd.f32 %v280, %v282
        %284 = vst.msk [vmem:[#allocation4] sm:$0xff] %vm272, %v283
        %p285 = scmp.eq.s32.totalorder %s22, 1
        %p286 = pnand %p285, %p226
        %p287 = pneg %p286
        // Predicated region
        $region37: #{tpu_custom_call.1} parent=27 // pred_check
          _
        $region38: #{tpu_custom_call.1} parent=27 // pred_check_branch
          %289 = sbr.rel (%p286) target = $region40
        $region39: #{tpu_custom_call.1} parent=27 // pred_region
          %v290 = vld [vmem:[#allocation2] sm:$0xff]
          %v291 = vld [vmem:[#allocation3] sm:$0xff]
          %v292 = vld [vmem:[#allocation4] sm:$0xff]
          %294 = vrot.lane.b32.xlu0 %v291, 1
          %v295 = vpop.permute.xlu0 %294
          %298 = vrot.lane.b32.xlu0 %v292, 2
          %v299 = vpop.permute.xlu0 %298
          %v301 = vsel %vm272, %v290, %v295
          %vm302 = vcmask 15360
          %v303 = vsel %vm302, %v301, %v299
          %vm304 = vcmask 23552
          %305 = vst.msk [vmem:[%s224] sm:$0xff] %vm304, %v303
        $region40: #{tpu_custom_call.1} parent=27 // pred_fallthru
          _
        %p306 = scmp.lt.s32.totalorder %s21, 0
        %s307 = scalar_select %p306, %s21, 0
        %s308 = smul.addr %s307, 8
        %s309 = scalar_lea.vmem %s2, %s308
        // Predicated region
        $region41: #{tpu_custom_call.1} parent=27 // pred_check
          %p310 = pneg %p117
        $region42: #{tpu_custom_call.1} parent=27 // pred_check_branch
          %312 = sbr.rel (%p310) target = $region44
        $region43: #{tpu_custom_call.1} parent=27 // pred_region
          _
        $region44: #{tpu_custom_call.1} parent=27 // pred_fallthru
          _
        // Predicated region
        $region45: #{tpu_custom_call.1} parent=27 // pred_check
          %p313 = pneg %p117
        $region46: #{tpu_custom_call.1} parent=27 // pred_check_branch
          %315 = sbr.rel (%p313) target = $region48
        $region47: #{tpu_custom_call.1} parent=27 // pred_region
          %p316 = scmp.lt.s32.totalorder %s21, 0
          %s317 = scalar_select %p316, %s21, 0
          %s318 = smul.addr %s317, 8
          %s319 = scalar_lea.vmem %s2, %s318
        $region48: #{tpu_custom_call.1} parent=27 // pred_fallthru
          _
      $region28: #{tpu_custom_call.1} parent=5 // pred_fallthru
        _
      %p320 = scmp.le.s32.totalorder 2, %s11
      // Predicated region
      $region49: #{tpu_custom_call.1} parent=5 // pred_check
        %p321 = pneg %p320
      $region50: #{tpu_custom_call.1} parent=5 // pred_check_branch
        %323 = sbr.rel (%p321) target = $region52
      $region51: #{tpu_custom_call.1} parent=5 // pred_region
        %s324 = ssub.s32 %s11, 2
      $region52: #{tpu_custom_call.1} parent=5 // pred_fallthru
        _
    $region6: #{tpu_custom_call.1} parent=1 // loop_footer
      %s15 = sadd.s32 1, %s11
    $region7: #{tpu_custom_call.1} parent=1 // loop_footer_branch
      %10 = sbr.rel target = $region3
    $region8: #{tpu_custom_call.1} parent=1 // loop_exit
      _
    %325 = vsyncpa [#allocation6], 1
    %s326 = scalar_lea.sflag [#allocation6], 1
    %327 = vsyncpa %s326, 1

</llo_original>
